<compile_context>
chip_gen: v7x
topology: tpu7x:2x2x1
jax: 0.10.0
libtpu: 0.0.40
codegen_flags: <defaults>
</compile_context>

<pallas_src>
import jax
import jax.numpy as jnp
from jax.experimental import pallas as pl
from jax.experimental.pallas import tpu as pltpu

N_OBSERVATIONS = 6
HIDDEN = 64
N_ACTIONS = 8

K_PAD = 8                       # features padded 6 -> 8 (cols 6,7 are zero)
ROW_PACK = 16                   # batch rows packed per 128-lane row (16 * 8 == 128)
LANE_X = ROW_PACK * K_PAD       # 128
LANE_H = ROW_PACK * HIDDEN      # 1024
LANE_Y = ROW_PACK * N_ACTIONS   # 128
ROW_ALIGN = 256                 # batch-row alignment: tile_rows multiple of 16 (bf16 pack)

DEFAULT_TILE_B = 16384          # rows per grid step; ~9 MiB VMEM incl. the f32 h intermediate
MIN_ROWS_FOR_SPLIT = 4096       # force >=2 tiles (v7x megacore) once the batch is this big


def _cdiv(a, b):
    return -(-a // b)


def _round_up(n, m):
    return _cdiv(n, m) * m


def pack_params(w1, b1, w2, b2, dtype=jnp.bfloat16):
    """Build block-diagonal, lane-packed weight slabs + broadcast bias rows.

    w1: (6, 64), b1: (64,), w2: (64, 8), b2: (8,)   (y = relu(x @ w1 + b1) @ w2 + b2,
    i.e. weights are stored transposed relative to PyTorch nn.Linear.weight).
    Returns W1_big (128, 1024), b1_row (1, 1024) f32, W2_big (1024, 128), b2_row (1, 128) f32.
    """
    w1p = jnp.zeros((K_PAD, HIDDEN), dtype).at[:N_OBSERVATIONS, :].set(w1.astype(dtype))
    eye = jnp.eye(ROW_PACK, dtype=dtype)
    W1_big = jnp.kron(eye, w1p)                               # (128, 1024)
    W2_big = jnp.kron(eye, w2.astype(dtype))                  # (1024, 128)
    b1_row = jnp.tile(jnp.reshape(b1, (HIDDEN,)).astype(jnp.float32), ROW_PACK)[None, :]
    b2_row = jnp.tile(jnp.reshape(b2, (N_ACTIONS,)).astype(jnp.float32), ROW_PACK)[None, :]
    return W1_big, b1_row, W2_big, b2_row


def dqn_kernel(x_ref, w1_ref, b1_ref, w2_ref, b2_ref, o_ref):
    # Layer 1: lane-dense MXU matmul with f32 accumulation, bias via a free VPU add.
    h = jnp.dot(x_ref[...], w1_ref[...], preferred_element_type=jnp.float32)
    h = jnp.maximum(h + b1_ref[...], 0.0).astype(w2_ref.dtype)
    # Layer 2.
    y = jnp.dot(h, w2_ref[...], preferred_element_type=jnp.float32)
    o_ref[...] = (y + b2_ref[...]).astype(o_ref.dtype)        # (tile_rows, 128) unmasked store


def dqn_forward(x, W1_big, b1_row, W2_big, b2_row, *, tile_b=DEFAULT_TILE_B):
    """Batched DQN forward.  x: (B, 6) float -> (B, 8) float32 Q-values."""
    assert x.shape[1] == N_OBSERVATIONS
    assert tile_b % ROW_ALIGN == 0, "tile_b must be a multiple of 256"
    B = x.shape[0]
    compute_dtype = W1_big.dtype

    # --- Tiling: pad to a multiple of 256 rows only; last tile carries <=256 junk rows.
    B_pad_min = _round_up(B, ROW_ALIGN)
    n_tiles = _cdiv(B_pad_min, tile_b)
    if n_tiles == 1 and B_pad_min >= 2 * MIN_ROWS_FOR_SPLIT:
        n_tiles = 2                                   # keep both v7x TensorCores busy
    tb = _round_up(_cdiv(B_pad_min, n_tiles), ROW_ALIGN)
    B_pad = n_tiles * tb
    rows, tile_rows = B_pad // ROW_PACK, tb // ROW_PACK

    # --- Pack: pad features 6 -> 8 with zeros, cast, pad batch tail, row-major reshape
    # so 16 batch rows occupy one 128-lane row (bit-identical reshape, single XLA fusion).
    xp = jnp.concatenate(
        [x.astype(compute_dtype), jnp.zeros((B, K_PAD - N_OBSERVATIONS), compute_dtype)],
        axis=1)
    xp = jnp.pad(xp, ((0, B_pad - B), (0, 0)))
    x_packed = xp.reshape(rows, LANE_X)

    itemsize = jnp.dtype(compute_dtype).itemsize
    cost = pl.CostEstimate(
        flops=4 * rows * LANE_X * LANE_H,             # kron-inflated MACs, both layers
        transcendentals=0,
        bytes_accessed=(rows * LANE_X * itemsize      # x
                        + LANE_X * LANE_H * itemsize + LANE_H * 4    # W1 + b1
                        + LANE_H * LANE_Y * itemsize + LANE_Y * 4    # W2 + b2
                        + rows * LANE_Y * 4))         # out (f32)

    out_packed = pl.pallas_call(
        dqn_kernel,
        out_shape=jax.ShapeDtypeStruct((rows, LANE_Y), jnp.float32),
        grid=(n_tiles,),
        in_specs=[
            pl.BlockSpec((tile_rows, LANE_X), lambda i: (i, 0)),
            pl.BlockSpec(W1_big.shape, lambda i: (0, 0)),   # resident across the grid
            pl.BlockSpec(b1_row.shape, lambda i: (0, 0)),
            pl.BlockSpec(W2_big.shape, lambda i: (0, 0)),   # resident across the grid
            pl.BlockSpec(b2_row.shape, lambda i: (0, 0)),
        ],
        out_specs=pl.BlockSpec((tile_rows, LANE_Y), lambda i: (i, 0)),
        compiler_params=pltpu.CompilerParams(
            dimension_semantics=("parallel",),        # v7x: shard batch tiles across TCs
            vmem_limit_bytes=32 * 1024 * 1024),
        cost_estimate=cost,
    )(x_packed, W1_big, b1_row, W2_big, b2_row)

    # Unpack: bit-identical row-major reshape back to (B_pad, 8); drop padded rows.
    return out_packed.reshape(B_pad, N_ACTIONS)[:B]


def init_params(key):
    # Mimic PyTorch nn.Linear default init: U(-1/sqrt(fan_in), 1/sqrt(fan_in)).
    k1, k2, k3, k4 = jax.random.split(key, 4)
    bound1 = 1.0 / jnp.sqrt(float(N_OBSERVATIONS))
    bound2 = 1.0 / jnp.sqrt(float(HIDDEN))
    w1 = jax.random.uniform(k1, (N_OBSERVATIONS, HIDDEN), jnp.float32, -bound1, bound1)
    b1 = jax.random.uniform(k2, (HIDDEN,), jnp.float32, -bound1, bound1)
    w2 = jax.random.uniform(k3, (HIDDEN, N_ACTIONS), jnp.float32, -bound2, bound2)
    b2 = jax.random.uniform(k4, (N_ACTIONS,), jnp.float32, -bound2, bound2)
    return w1, b1, w2, b2


if __name__ == "__main__":
    key = jax.random.PRNGKey(0)
    k_p, k_x, k_x2 = jax.random.split(key, 3)
    w1, b1, w2, b2 = init_params(k_p)

    def reference(xx):
        return jnp.maximum(xx @ w1 + b1, 0.0) @ w2 + b2

    x_small = jax.random.normal(k_x, (8, N_OBSERVATIONS), jnp.float32)
    x_big = jax.random.normal(k_x2, (3000, N_OBSERVATIONS), jnp.float32)

    # 1) f32 path, single resident block: exact check of the packing / bias math.
    params_f32 = pack_params(w1, b1, w2, b2, dtype=jnp.float32)
    out_small = jax.block_until_ready(dqn_forward(x_small, *params_f32))
    assert out_small.shape == (8, N_ACTIONS)
    assert jnp.allclose(out_small, reference(x_small), atol=1e-4, rtol=1e-4)

    # 2) bf16 fast path (default for v5e/v6e/v7x), small batch; bf16-loosened tolerance.
    params_bf16 = pack_params(w1, b1, w2, b2, dtype=jnp.bfloat16)
    out_small_bf = jax.block_until_ready(dqn_forward(x_small, *params_bf16))
    assert jnp.allclose(out_small_bf, reference(x_small), atol=5e-2, rtol=5e-2)

    # 3) bf16, non-multiple batch with a small tile to exercise batch padding and the
    #    multi-tile "parallel" grid (3 tiles of 1024 rows).
    out_big = jax.block_until_ready(dqn_forward(x_big, *params_bf16, tile_b=1024))
    assert out_big.shape == (3000, N_ACTIONS)
    assert jnp.allclose(out_big, reference(x_big), atol=5e-2, rtol=5e-2)

    print("KERNEL_OK")
</pallas_src>

<mosaic_0001>
module attributes {stable_mosaic.version = 11 : i64} {
  func.func @dqn_kernel(%arg0: i32, %arg1: memref<16x128xf32, #tpu.memory_space<vmem>>, %arg2: memref<128x1024xf32, #tpu.memory_space<vmem>>, %arg3: memref<1x1024xf32, #tpu.memory_space<vmem>>, %arg4: memref<1024x128xf32, #tpu.memory_space<vmem>>, %arg5: memref<1x128xf32, #tpu.memory_space<vmem>>, %arg6: memref<16x128xf32, #tpu.memory_space<vmem>>) attributes {dimension_semantics = [#tpu.dimension_semantics<parallel>], iteration_bounds = array<i64: 1>, scalar_prefetch = 0 : i64, scratch_operands = 0 : i64, tpu.core_type = #tpu.core_type<tc>, window_params = [{transform_indices = @transform_0, window_bounds = array<i64: 16, 128>}, {pipeline_mode = #tpu.pipeline_mode<synchronous>, transform_indices = @transform_1, window_bounds = array<i64: 128, 1024>}, {pipeline_mode = #tpu.pipeline_mode<synchronous>, transform_indices = @transform_2, window_bounds = array<i64: 1, 1024>}, {pipeline_mode = #tpu.pipeline_mode<synchronous>, transform_indices = @transform_3, window_bounds = array<i64: 1024, 128>}, {pipeline_mode = #tpu.pipeline_mode<synchronous>, transform_indices = @transform_4, window_bounds = array<i64: 1, 128>}, {transform_indices = @transform_5, window_bounds = array<i64: 16, 128>}]} {
    %c0 = arith.constant 0 : index
    %c0_0 = arith.constant 0 : index
    %0 = vector.load %arg1[%c0, %c0_0] : memref<16x128xf32, #tpu.memory_space<vmem>>, vector<16x128xf32>
    %c0_1 = arith.constant 0 : index
    %c0_2 = arith.constant 0 : index
    %1 = vector.load %arg2[%c0_1, %c0_2] : memref<128x1024xf32, #tpu.memory_space<vmem>>, vector<128x1024xf32>
    %cst = arith.constant dense<0.000000e+00> : vector<16x1024xf32>
    %2 = tpu.matmul %0, %1, %cst {dimension_numbers = #tpu.dot_dimension_numbers<[1], [0], [0], [1], [0, 0, 1, 1], [], []>} : vector<16x128xf32>, vector<128x1024xf32>, vector<16x1024xf32> -> vector<16x1024xf32>
    %c0_3 = arith.constant 0 : index
    %c0_4 = arith.constant 0 : index
    %3 = vector.load %arg3[%c0_3, %c0_4] : memref<1x1024xf32, #tpu.memory_space<vmem>>, vector<1x1024xf32>
    %4 = vector.broadcast %3 : vector<1x1024xf32> to vector<16x1024xf32>
    %5 = arith.addf %2, %4 : vector<16x1024xf32>
    %cst_5 = arith.constant 0.000000e+00 : f32
    %6 = vector.broadcast %cst_5 : f32 to vector<16x1024xf32>
    %7 = arith.maximumf %5, %6 : vector<16x1024xf32>
    %c0_6 = arith.constant 0 : index
    %c0_7 = arith.constant 0 : index
    %8 = vector.load %arg4[%c0_6, %c0_7] : memref<1024x128xf32, #tpu.memory_space<vmem>>, vector<1024x128xf32>
    %cst_8 = arith.constant dense<0.000000e+00> : vector<16x128xf32>
    %9 = tpu.matmul %7, %8, %cst_8 {dimension_numbers = #tpu.dot_dimension_numbers<[1], [0], [0], [1], [0, 0, 1, 1], [], []>} : vector<16x1024xf32>, vector<1024x128xf32>, vector<16x128xf32> -> vector<16x128xf32>
    %c0_9 = arith.constant 0 : index
    %c0_10 = arith.constant 0 : index
    %10 = vector.load %arg5[%c0_9, %c0_10] : memref<1x128xf32, #tpu.memory_space<vmem>>, vector<1x128xf32>
    %11 = vector.broadcast %10 : vector<1x128xf32> to vector<16x128xf32>
    %12 = arith.addf %9, %11 : vector<16x128xf32>
    %c0_11 = arith.constant 0 : index
    %c0_12 = arith.constant 0 : index
    %13 = vector.load %arg6[%c0_11, %c0_12] : memref<16x128xf32, #tpu.memory_space<vmem>>, vector<16x128xf32>
    tpu.vector_store %arg6[%c0_11, %c0_12], %12 {strides = array<i32>} : memref<16x128xf32, #tpu.memory_space<vmem>>, vector<16x128xf32>,
    return
  }
  func.func @transform_0(%arg0: i32) -> (i32, i32) {
    %c0_i32 = arith.constant 0 : i32
    %c0_i32_0 = arith.constant 0 : i32
    return %arg0, %c0_i32 : i32, i32
  }
  func.func @transform_1(%arg0: i32) -> (i32, i32) {
    %c0_i32 = arith.constant 0 : i32
    %c0_i32_0 = arith.constant 0 : i32
    %c0_i32_1 = arith.constant 0 : i32
    return %c0_i32, %c0_i32_0 : i32, i32
  }
  func.func @transform_2(%arg0: i32) -> (i32, i32) {
    %c0_i32 = arith.constant 0 : i32
    %c0_i32_0 = arith.constant 0 : i32
    %c0_i32_1 = arith.constant 0 : i32
    return %c0_i32, %c0_i32_0 : i32, i32
  }
  func.func @transform_3(%arg0: i32) -> (i32, i32) {
    %c0_i32 = arith.constant 0 : i32
    %c0_i32_0 = arith.constant 0 : i32
    %c0_i32_1 = arith.constant 0 : i32
    return %c0_i32, %c0_i32_0 : i32, i32
  }
  func.func @transform_4(%arg0: i32) -> (i32, i32) {
    %c0_i32 = arith.constant 0 : i32
    %c0_i32_0 = arith.constant 0 : i32
    %c0_i32_1 = arith.constant 0 : i32
    return %c0_i32, %c0_i32_0 : i32, i32
  }
  func.func @transform_5(%arg0: i32) -> (i32, i32) {
    %c0_i32 = arith.constant 0 : i32
    %c0_i32_0 = arith.constant 0 : i32
    return %arg0, %c0_i32 : i32, i32
  }
}

</mosaic_0001>

<llo_original>
// kernel: tpu_custom_call.1
$region0: #{tpu_custom_call.1}
  #allocation0 [shape = 'u32[]', space=smem, size = 0x4, offset = 0x4, fixed_abs, tag = 'smem constant byte address 0x4 - core index']
  #allocation1 [shape = 'u32[144,128]{1,0:T(1,128)}', space=vmem, size = 0x12000, scoped, tag = 'internal scratch']
  %s0 = inlined_call_operand.hbm [shape: f32[16,128], index: 0, kind: input, shape index: {}]
  %s1 = inlined_call_operand.hbm [shape: f32[128,1024], index: 1, kind: input, shape index: {}]
  %s2 = inlined_call_operand.hbm [shape: f32[1,1024], index: 2, kind: input, shape index: {}]
  %s3 = inlined_call_operand.hbm [shape: f32[1024,128], index: 3, kind: input, shape index: {}]
  %s4 = inlined_call_operand.vmem [shape: f32[1,128], index: 4, kind: input, shape index: {}]
  %s5 = inlined_call_operand.hbm [shape: f32[16,128], index: 5, kind: output, shape index: {}]
  %s6 = sld [smem:[#allocation0]]
  $region46: #{tpu_custom_call.1} parent=0
    _
  %s8 = ssub.s32 1, %s6
  %s9 = scalar_select 0, %s8, %s6
  $region1: #{tpu_custom_call.1} parent=0
    #allocation2 [shape = 'u8[8192]{0}', space=vmem, size = 0x2000, scoped, tag = 'input window, operand 0, single buffered']
    #allocation3 [shape = 's32[1]{0}', space=sflag, size = 0x4, scoped, tag = 'scoped memory for tpu_custom_call.1']
    #allocation4 [shape = 's32[1]{0}', space=sflag, size = 0x4, scoped, tag = 'scoped memory for tpu_custom_call.1']
    #allocation5 [shape = 'u8[524288]{0}', space=vmem, size = 0x80000, scoped, tag = 'input window, operand 1, single buffered']
    #allocation6 [shape = 's32[1]{0}', space=sflag, size = 0x4, scoped, tag = 'scoped memory for tpu_custom_call.1']
    #allocation7 [shape = 'u8[4096]{0}', space=vmem, size = 0x1000, scoped, tag = 'input window, operand 2, single buffered']
    #allocation8 [shape = 'u8[524288]{0}', space=vmem, size = 0x80000, scoped, tag = 'input window, operand 3, single buffered']
    #allocation9 [shape = 's32[1]{0}', space=sflag, size = 0x4, scoped, tag = 'scoped memory for tpu_custom_call.1']
    #allocation10 [shape = 'u8[8192]{0}', space=vmem, size = 0x2000, scoped, tag = 'output window, operand 0, single buffered']
    %10 = vsyncpa [#allocation3], 0
    %11 = vsyncpa [#allocation6], 0
    %12 = vsyncpa [#allocation9], 0
    %13 = vsyncpa [#allocation4], 0
    // Predicated region
    $region2: #{tpu_custom_call.1} parent=1 // pred_check
      _
    $region3: #{tpu_custom_call.1} parent=1 // pred_check_branch
      %15 = sbr.rel (0) target = $region5
    $region4: #{tpu_custom_call.1} parent=1 // pred_region
      %s17 = ssub.s32 256, 256
      %18 = vsyncadd [#allocation3], %s17
      %s19 = sshll.u32 [#allocation2], 4
      %s20 = int_to_ptr.vmem [resolvable:$true] %s19
      %25 = dma.hbm_to_vmem [thread:$0]  %s0, 256, %s20, [#allocation3], 128, 128, 8
    $region5: #{tpu_custom_call.1} parent=1 // pred_fallthru
      _
    // Predicated region
    $region6: #{tpu_custom_call.1} parent=1 // pred_check
      _
    $region7: #{tpu_custom_call.1} parent=1 // pred_check_branch
      %27 = sbr.rel (0) target = $region9
    $region8: #{tpu_custom_call.1} parent=1 // pred_region
      %s29 = ssub.s32 16384, 16384
      %30 = vsyncadd [#allocation6], %s29
      %s31 = sshll.u32 [#allocation5], 4
      %s32 = int_to_ptr.vmem [resolvable:$true] %s31
      %37 = dma.hbm_to_vmem [thread:$0]  %s1, 16384, %s32, [#allocation6], 1024, 1024, 64
    $region9: #{tpu_custom_call.1} parent=1 // pred_fallthru
      _
    // Predicated region
    $region10: #{tpu_custom_call.1} parent=1 // pred_check
      _
    $region11: #{tpu_custom_call.1} parent=1 // pred_check_branch
      %39 = sbr.rel (0) target = $region13
    $region12: #{tpu_custom_call.1} parent=1 // pred_region
      %s41 = ssub.s32 128, 128
      %42 = vsyncadd [#allocation6], %s41
      %s44 = sshll.u32 [#allocation7], 4
      %s45 = int_to_ptr.vmem [resolvable:$true] %s44
      %47 = dma.hbm_to_vmem [thread:$0]  %s2, 128, %s45, [#allocation6]
    $region13: #{tpu_custom_call.1} parent=1 // pred_fallthru
      _
    // Predicated region
    $region14: #{tpu_custom_call.1} parent=1 // pred_check
      _
    $region15: #{tpu_custom_call.1} parent=1 // pred_check_branch
      %49 = sbr.rel (0) target = $region17
    $region16: #{tpu_custom_call.1} parent=1 // pred_region
      %s51 = ssub.s32 16384, 16384
      %52 = vsyncadd [#allocation9], %s51
      %s53 = sshll.u32 [#allocation8], 4
      %s54 = int_to_ptr.vmem [resolvable:$true] %s53
      %59 = dma.hbm_to_vmem [thread:$0]  %s3, 16384, %s54, [#allocation9], 128, 128, 8
    $region17: #{tpu_custom_call.1} parent=1 // pred_fallthru
      _
    // Predicated region
    $region18: #{tpu_custom_call.1} parent=1 // pred_check
      _
    $region19: #{tpu_custom_call.1} parent=1 // pred_check_branch
      %61 = sbr.rel (0) target = $region21
    $region20: #{tpu_custom_call.1} parent=1 // pred_region
      _
    $region21: #{tpu_custom_call.1} parent=1 // pred_fallthru
      _
    // Predicated region
    $region22: #{tpu_custom_call.1} parent=1 // pred_check
      _
    $region23: #{tpu_custom_call.1} parent=1 // pred_check_branch
      %63 = sbr.rel (0) target = $region25
    $region24: #{tpu_custom_call.1} parent=1 // pred_region
      %64 = dma.done [#allocation3], 256
    $region25: #{tpu_custom_call.1} parent=1 // pred_fallthru
      _
    // Predicated region
    $region26: #{tpu_custom_call.1} parent=1 // pred_check
      _
    $region27: #{tpu_custom_call.1} parent=1 // pred_check_branch
      %66 = sbr.rel (0) target = $region29
    $region28: #{tpu_custom_call.1} parent=1 // pred_region
      %67 = dma.done [#allocation6], 16384
    $region29: #{tpu_custom_call.1} parent=1 // pred_fallthru
      _
    // Predicated region
    $region30: #{tpu_custom_call.1} parent=1 // pred_check
      _
    $region31: #{tpu_custom_call.1} parent=1 // pred_check_branch
      %69 = sbr.rel (0) target = $region33
    $region32: #{tpu_custom_call.1} parent=1 // pred_region
      %70 = dma.done [#allocation6], 128
    $region33: #{tpu_custom_call.1} parent=1 // pred_fallthru
      _
    // Predicated region
    $region34: #{tpu_custom_call.1} parent=1 // pred_check
      _
    $region35: #{tpu_custom_call.1} parent=1 // pred_check_branch
      %72 = sbr.rel (0) target = $region37
    $region36: #{tpu_custom_call.1} parent=1 // pred_region
      %73 = dma.done [#allocation9], 16384
    $region37: #{tpu_custom_call.1} parent=1 // pred_fallthru
      _
    %v74 = vld [vmem:[#allocation2] sm:$0xff]
    %v75 = vld [vmem:[#allocation2 + $0x8] sm:$0xff]
    %v76 = vld [vmem:[#allocation5] sm:$0xff]
    %v77 = vld [vmem:[#allocation5 + $0x8] sm:$0xff]
    %v78 = vld [vmem:[#allocation5 + $0x10] sm:$0xff]
    %v79 = vld [vmem:[#allocation5 + $0x18] sm:$0xff]
    %v80 = vld [vmem:[#allocation5 + $0x20] sm:$0xff]
    %v81 = vld [vmem:[#allocation5 + $0x28] sm:$0xff]
    %v82 = vld [vmem:[#allocation5 + $0x30] sm:$0xff]
    %v83 = vld [vmem:[#allocation5 + $0x38] sm:$0xff]
    %v84 = vld [vmem:[#allocation5 + $0x40] sm:$0xff]
    %v85 = vld [vmem:[#allocation5 + $0x48] sm:$0xff]
    %v86 = vld [vmem:[#allocation5 + $0x50] sm:$0xff]
    %v87 = vld [vmem:[#allocation5 + $0x58] sm:$0xff]
    %v88 = vld [vmem:[#allocation5 + $0x60] sm:$0xff]
    %v89 = vld [vmem:[#allocation5 + $0x68] sm:$0xff]
    %v90 = vld [vmem:[#allocation5 + $0x70] sm:$0xff]
    %v91 = vld [vmem:[#allocation5 + $0x78] sm:$0xff]
    %v92 = vld [vmem:[#allocation5 + $0x80] sm:$0xff]
    %v93 = vld [vmem:[#allocation5 + $0x88] sm:$0xff]
    %v94 = vld [vmem:[#allocation5 + $0x90] sm:$0xff]
    %v95 = vld [vmem:[#allocation5 + $0x98] sm:$0xff]
    %v96 = vld [vmem:[#allocation5 + $0xa0] sm:$0xff]
    %v97 = vld [vmem:[#allocation5 + $0xa8] sm:$0xff]
    %v98 = vld [vmem:[#allocation5 + $0xb0] sm:$0xff]
    %v99 = vld [vmem:[#allocation5 + $0xb8] sm:$0xff]
    %v100 = vld [vmem:[#allocation5 + $0xc0] sm:$0xff]
    %v101 = vld [vmem:[#allocation5 + $0xc8] sm:$0xff]
    %v102 = vld [vmem:[#allocation5 + $0xd0] sm:$0xff]
    %v103 = vld [vmem:[#allocation5 + $0xd8] sm:$0xff]
    %v104 = vld [vmem:[#allocation5 + $0xe0] sm:$0xff]
    %v105 = vld [vmem:[#allocation5 + $0xe8] sm:$0xff]
    %v106 = vld [vmem:[#allocation5 + $0xf0] sm:$0xff]
    %v107 = vld [vmem:[#allocation5 + $0xf8] sm:$0xff]
    %v108 = vld [vmem:[#allocation5 + $0x100] sm:$0xff]
    %v109 = vld [vmem:[#allocation5 + $0x108] sm:$0xff]
    %v110 = vld [vmem:[#allocation5 + $0x110] sm:$0xff]
    %v111 = vld [vmem:[#allocation5 + $0x118] sm:$0xff]
    %v112 = vld [vmem:[#allocation5 + $0x120] sm:$0xff]
    %v113 = vld [vmem:[#allocation5 + $0x128] sm:$0xff]
    %v114 = vld [vmem:[#allocation5 + $0x130] sm:$0xff]
    %v115 = vld [vmem:[#allocation5 + $0x138] sm:$0xff]
    %v116 = vld [vmem:[#allocation5 + $0x140] sm:$0xff]
    %v117 = vld [vmem:[#allocation5 + $0x148] sm:$0xff]
    %v118 = vld [vmem:[#allocation5 + $0x150] sm:$0xff]
    %v119 = vld [vmem:[#allocation5 + $0x158] sm:$0xff]
    %v120 = vld [vmem:[#allocation5 + $0x160] sm:$0xff]
    %v121 = vld [vmem:[#allocation5 + $0x168] sm:$0xff]
    %v122 = vld [vmem:[#allocation5 + $0x170] sm:$0xff]
    %v123 = vld [vmem:[#allocation5 + $0x178] sm:$0xff]
    %v124 = vld [vmem:[#allocation5 + $0x180] sm:$0xff]
    %v125 = vld [vmem:[#allocation5 + $0x188] sm:$0xff]
    %v126 = vld [vmem:[#allocation5 + $0x190] sm:$0xff]
    %v127 = vld [vmem:[#allocation5 + $0x198] sm:$0xff]
    %v128 = vld [vmem:[#allocation5 + $0x1a0] sm:$0xff]
    %v129 = vld [vmem:[#allocation5 + $0x1a8] sm:$0xff]
    %v130 = vld [vmem:[#allocation5 + $0x1b0] sm:$0xff]
    %v131 = vld [vmem:[#allocation5 + $0x1b8] sm:$0xff]
    %v132 = vld [vmem:[#allocation5 + $0x1c0] sm:$0xff]
    %v133 = vld [vmem:[#allocation5 + $0x1c8] sm:$0xff]
    %v134 = vld [vmem:[#allocation5 + $0x1d0] sm:$0xff]
    %v135 = vld [vmem:[#allocation5 + $0x1d8] sm:$0xff]
    %v136 = vld [vmem:[#allocation5 + $0x1e0] sm:$0xff]
    %v137 = vld [vmem:[#allocation5 + $0x1e8] sm:$0xff]
    %v138 = vld [vmem:[#allocation5 + $0x1f0] sm:$0xff]
    %v139 = vld [vmem:[#allocation5 + $0x1f8] sm:$0xff]
    %v140 = vld [vmem:[#allocation5 + $0x200] sm:$0xff]
    %v141 = vld [vmem:[#allocation5 + $0x208] sm:$0xff]
    %v142 = vld [vmem:[#allocation5 + $0x210] sm:$0xff]
    %v143 = vld [vmem:[#allocation5 + $0x218] sm:$0xff]
    %v144 = vld [vmem:[#allocation5 + $0x220] sm:$0xff]
    %v145 = vld [vmem:[#allocation5 + $0x228] sm:$0xff]
    %v146 = vld [vmem:[#allocation5 + $0x230] sm:$0xff]
    %v147 = vld [vmem:[#allocation5 + $0x238] sm:$0xff]
    %v148 = vld [vmem:[#allocation5 + $0x240] sm:$0xff]
    %v149 = vld [vmem:[#allocation5 + $0x248] sm:$0xff]
    %v150 = vld [vmem:[#allocation5 + $0x250] sm:$0xff]
    %v151 = vld [vmem:[#allocation5 + $0x258] sm:$0xff]
    %v152 = vld [vmem:[#allocation5 + $0x260] sm:$0xff]
    %v153 = vld [vmem:[#allocation5 + $0x268] sm:$0xff]
    %v154 = vld [vmem:[#allocation5 + $0x270] sm:$0xff]
    %v155 = vld [vmem:[#allocation5 + $0x278] sm:$0xff]
    %v156 = vld [vmem:[#allocation5 + $0x280] sm:$0xff]
    %v157 = vld [vmem:[#allocation5 + $0x288] sm:$0xff]
    %v158 = vld [vmem:[#allocation5 + $0x290] sm:$0xff]
    %v159 = vld [vmem:[#allocation5 + $0x298] sm:$0xff]
    %v160 = vld [vmem:[#allocation5 + $0x2a0] sm:$0xff]
    %v161 = vld [vmem:[#allocation5 + $0x2a8] sm:$0xff]
    %v162 = vld [vmem:[#allocation5 + $0x2b0] sm:$0xff]
    %v163 = vld [vmem:[#allocation5 + $0x2b8] sm:$0xff]
    %v164 = vld [vmem:[#allocation5 + $0x2c0] sm:$0xff]
    %v165 = vld [vmem:[#allocation5 + $0x2c8] sm:$0xff]
    %v166 = vld [vmem:[#allocation5 + $0x2d0] sm:$0xff]
    %v167 = vld [vmem:[#allocation5 + $0x2d8] sm:$0xff]
    %v168 = vld [vmem:[#allocation5 + $0x2e0] sm:$0xff]
    %v169 = vld [vmem:[#allocation5 + $0x2e8] sm:$0xff]
    %v170 = vld [vmem:[#allocation5 + $0x2f0] sm:$0xff]
    %v171 = vld [vmem:[#allocation5 + $0x2f8] sm:$0xff]
    %v172 = vld [vmem:[#allocation5 + $0x300] sm:$0xff]
    %v173 = vld [vmem:[#allocation5 + $0x308] sm:$0xff]
    %v174 = vld [vmem:[#allocation5 + $0x310] sm:$0xff]
    %v175 = vld [vmem:[#allocation5 + $0x318] sm:$0xff]
    %v176 = vld [vmem:[#allocation5 + $0x320] sm:$0xff]
    %v177 = vld [vmem:[#allocation5 + $0x328] sm:$0xff]
    %v178 = vld [vmem:[#allocation5 + $0x330] sm:$0xff]
    %v179 = vld [vmem:[#allocation5 + $0x338] sm:$0xff]
    %v180 = vld [vmem:[#allocation5 + $0x340] sm:$0xff]
    %v181 = vld [vmem:[#allocation5 + $0x348] sm:$0xff]
    %v182 = vld [vmem:[#allocation5 + $0x350] sm:$0xff]
    %v183 = vld [vmem:[#allocation5 + $0x358] sm:$0xff]
    %v184 = vld [vmem:[#allocation5 + $0x360] sm:$0xff]
    %v185 = vld [vmem:[#allocation5 + $0x368] sm:$0xff]
    %v186 = vld [vmem:[#allocation5 + $0x370] sm:$0xff]
    %v187 = vld [vmem:[#allocation5 + $0x378] sm:$0xff]
    %v188 = vld [vmem:[#allocation5 + $0x380] sm:$0xff]
    %v189 = vld [vmem:[#allocation5 + $0x388] sm:$0xff]
    %v190 = vld [vmem:[#allocation5 + $0x390] sm:$0xff]
    %v191 = vld [vmem:[#allocation5 + $0x398] sm:$0xff]
    %v192 = vld [vmem:[#allocation5 + $0x3a0] sm:$0xff]
    %v193 = vld [vmem:[#allocation5 + $0x3a8] sm:$0xff]
    %v194 = vld [vmem:[#allocation5 + $0x3b0] sm:$0xff]
    %v195 = vld [vmem:[#allocation5 + $0x3b8] sm:$0xff]
    %v196 = vld [vmem:[#allocation5 + $0x3c0] sm:$0xff]
    %v197 = vld [vmem:[#allocation5 + $0x3c8] sm:$0xff]
    %v198 = vld [vmem:[#allocation5 + $0x3d0] sm:$0xff]
    %v199 = vld [vmem:[#allocation5 + $0x3d8] sm:$0xff]
    %v200 = vld [vmem:[#allocation5 + $0x3e0] sm:$0xff]
    %v201 = vld [vmem:[#allocation5 + $0x3e8] sm:$0xff]
    %v202 = vld [vmem:[#allocation5 + $0x3f0] sm:$0xff]
    %v203 = vld [vmem:[#allocation5 + $0x3f8] sm:$0xff]
    %v204 = vld [vmem:[#allocation7] sm:$0xff]
    %v206 = vlaneseq
    %v207 = vshrl.u32 %v206, 7
    %v208 = vsub.s32 0, %v207
    %v209 = vrot.slane %v204, %v208
    %v210 = vlaneseq
    %v211 = vshrl.u32 %v210, 7
    %v212 = vsub.s32 1, %v211
    %v213 = vrot.slane %v204, %v212
    %v214 = vlaneseq
    %v215 = vshrl.u32 %v214, 7
    %v216 = vsub.s32 2, %v215
    %v217 = vrot.slane %v204, %v216
    %v218 = vlaneseq
    %v219 = vshrl.u32 %v218, 7
    %v220 = vsub.s32 3, %v219
    %v221 = vrot.slane %v204, %v220
    %v222 = vlaneseq
    %v223 = vshrl.u32 %v222, 7
    %v224 = vsub.s32 4, %v223
    %v225 = vrot.slane %v204, %v224
    %v226 = vlaneseq
    %v227 = vshrl.u32 %v226, 7
    %v228 = vsub.s32 5, %v227
    %v229 = vrot.slane %v204, %v228
    %v230 = vlaneseq
    %v231 = vshrl.u32 %v230, 7
    %v232 = vsub.s32 6, %v231
    %v233 = vrot.slane %v204, %v232
    %v234 = vlaneseq
    %v235 = vshrl.u32 %v234, 7
    %v236 = vsub.s32 7, %v235
    %v237 = vrot.slane %v204, %v236
    %246 = vmatprep.subr.mxu0 %v77
    %247 = vmatpush1.msra.mxu0 %v76
    %248 = vmatprep.subr.mxu0 %v85
    %249 = vmatpush1.msra.mxu0 %v84
    %250 = vmatprep.subr.mxu0 %v93
    %251 = vmatpush1.msra.mxu0 %v92
    %252 = vmatprep.subr.mxu0 %v101
    %253 = vmatpush1.msra.mxu0 %v100
    %254 = vmatprep.subr.mxu0 %v109
    %255 = vmatpush1.msra.mxu0 %v108
    %256 = vmatprep.subr.mxu0 %v117
    %257 = vmatpush1.msra.mxu0 %v116
    %258 = vmatprep.subr.mxu0 %v125
    %259 = vmatpush1.msra.mxu0 %v124
    %260 = vmatprep.subr.mxu0 %v133
    %261 = vmatpush1.msra.mxu0 %v132
    %262 = vmatprep.subr.mxu0 %v141
    %263 = vmatpush1.msra.mxu0 %v140
    %264 = vmatprep.subr.mxu0 %v149
    %265 = vmatpush1.msra.mxu0 %v148
    %266 = vmatprep.subr.mxu0 %v157
    %267 = vmatpush1.msra.mxu0 %v156
    %268 = vmatprep.subr.mxu0 %v165
    %269 = vmatpush1.msra.mxu0 %v164
    %270 = vmatprep.subr.mxu0 %v173
    %271 = vmatpush1.msra.mxu0 %v172
    %272 = vmatprep.subr.mxu0 %v181
    %273 = vmatpush1.msra.mxu0 %v180
    %274 = vmatprep.subr.mxu0 %v189
    %275 = vmatpush1.msra.mxu0 %v188
    %276 = vmatprep.subr.mxu0 %v197
    %277 = vmatpush1.msra.mxu0 %v196
    %278 = vmatprep.subr.mxu0 0.0
    %279 = vmatpush1.msra.mxu0 0.0
    %280 = vmatprep.subr.mxu0 0.0
    %281 = vmatpush1.msra.mxu0 0.0
    %282 = vmatprep.subr.mxu0 0.0
    %283 = vmatpush1.msra.mxu0 0.0
    %284 = vmatprep.subr.mxu0 0.0
    %285 = vmatpush1.msra.mxu0 0.0
    %286 = vmatprep.subr.mxu0 0.0
    %287 = vmatpush1.msra.mxu0 0.0
    %288 = vmatprep.subr.mxu0 0.0
    %289 = vmatpush1.msra.mxu0 0.0
    %290 = vmatprep.subr.mxu0 0.0
    %291 = vmatpush1.msra.mxu0 0.0
    %292 = vmatprep.subr.mxu0 0.0
    %293 = vmatpush1.msra.mxu0 0.0
    %294 = vmatprep.subr.mxu0 0.0
    %295 = vmatpush1.msra.mxu0 0.0
    %296 = vmatprep.subr.mxu0 0.0
    %297 = vmatpush1.msra.mxu0 0.0
    %298 = vmatprep.subr.mxu0 0.0
    %299 = vmatpush1.msra.mxu0 0.0
    %300 = vmatprep.subr.mxu0 0.0
    %301 = vmatpush1.msra.mxu0 0.0
    %302 = vmatprep.subr.mxu0 0.0
    %303 = vmatpush1.msra.mxu0 0.0
    %304 = vmatprep.subr.mxu0 0.0
    %305 = vmatpush1.msra.mxu0 0.0
    %306 = vmatprep.subr.mxu0 0.0
    %307 = vmatpush1.msra.mxu0 0.0
    %308 = vmatprep.subr.mxu0 0.0
    %309 = vmatpush1.msra.mxu0 0.0
    %310 = vmatprep.mubr.f32.mxu0 0.0
    %311 = vmatmul.mubr.f32.gmra.mrb[0].mxu0 %v74
    %v312 = vpop.f32.mrb[0].mxu0
    %v313 = vadd.f32 %v209, %v312
    %v314 = vpop.f32.mrb[0].mxu0
    %v315 = vadd.f32 %v213, %v314
    %316 = vmatprep.mubr.f32.mxu0 0.0
    %317 = vmatmul.mubr.f32.gmra.mrb[0].mxu0 %v75
    %v318 = vpop.f32.mrb[0].mxu0
    %v319 = vadd.f32 %v209, %v318
    %v320 = vpop.f32.mrb[0].mxu0
    %v321 = vadd.f32 %v213, %v320
    %322 = vdwg.mxu0
    %323 = vmatprep.subr.mxu0 %v79
    %324 = vmatpush1.msra.mxu0 %v78
    %325 = vmatprep.subr.mxu0 %v87
    %326 = vmatpush1.msra.mxu0 %v86
    %327 = vmatprep.subr.mxu0 %v95
    %328 = vmatpush1.msra.mxu0 %v94
    %329 = vmatprep.subr.mxu0 %v103
    %330 = vmatpush1.msra.mxu0 %v102
    %331 = vmatprep.subr.mxu0 %v111
    %332 = vmatpush1.msra.mxu0 %v110
    %333 = vmatprep.subr.mxu0 %v119
    %334 = vmatpush1.msra.mxu0 %v118
    %335 = vmatprep.subr.mxu0 %v127
    %336 = vmatpush1.msra.mxu0 %v126
    %337 = vmatprep.subr.mxu0 %v135
    %338 = vmatpush1.msra.mxu0 %v134
    %339 = vmatprep.subr.mxu0 %v143
    %340 = vmatpush1.msra.mxu0 %v142
    %341 = vmatprep.subr.mxu0 %v151
    %342 = vmatpush1.msra.mxu0 %v150
    %343 = vmatprep.subr.mxu0 %v159
    %344 = vmatpush1.msra.mxu0 %v158
    %345 = vmatprep.subr.mxu0 %v167
    %346 = vmatpush1.msra.mxu0 %v166
    %347 = vmatprep.subr.mxu0 %v175
    %348 = vmatpush1.msra.mxu0 %v174
    %349 = vmatprep.subr.mxu0 %v183
    %350 = vmatpush1.msra.mxu0 %v182
    %351 = vmatprep.subr.mxu0 %v191
    %352 = vmatpush1.msra.mxu0 %v190
    %353 = vmatprep.subr.mxu0 %v199
    %354 = vmatpush1.msra.mxu0 %v198
    %355 = vmatprep.subr.mxu0 0.0
    %356 = vmatpush1.msra.mxu0 0.0
    %357 = vmatprep.subr.mxu0 0.0
    %358 = vmatpush1.msra.mxu0 0.0
    %359 = vmatprep.subr.mxu0 0.0
    %360 = vmatpush1.msra.mxu0 0.0
    %361 = vmatprep.subr.mxu0 0.0
    %362 = vmatpush1.msra.mxu0 0.0
    %363 = vmatprep.subr.mxu0 0.0
    %364 = vmatpush1.msra.mxu0 0.0
    %365 = vmatprep.subr.mxu0 0.0
    %366 = vmatpush1.msra.mxu0 0.0
    %367 = vmatprep.subr.mxu0 0.0
    %368 = vmatpush1.msra.mxu0 0.0
    %369 = vmatprep.subr.mxu0 0.0
    %370 = vmatpush1.msra.mxu0 0.0
    %371 = vmatprep.subr.mxu0 0.0
    %372 = vmatpush1.msra.mxu0 0.0
    %373 = vmatprep.subr.mxu0 0.0
    %374 = vmatpush1.msra.mxu0 0.0
    %375 = vmatprep.subr.mxu0 0.0
    %376 = vmatpush1.msra.mxu0 0.0
    %377 = vmatprep.subr.mxu0 0.0
    %378 = vmatpush1.msra.mxu0 0.0
    %379 = vmatprep.subr.mxu0 0.0
    %380 = vmatpush1.msra.mxu0 0.0
    %381 = vmatprep.subr.mxu0 0.0
    %382 = vmatpush1.msra.mxu0 0.0
    %383 = vmatprep.subr.mxu0 0.0
    %384 = vmatpush1.msra.mxu0 0.0
    %385 = vmatprep.subr.mxu0 0.0
    %386 = vmatpush1.msra.mxu0 0.0
    %387 = vmatprep.mubr.f32.mxu0 0.0
    %388 = vmatmul.mubr.f32.gmra.mrb[0].mxu0 %v74
    %v389 = vpop.f32.mrb[0].mxu0
    %v390 = vadd.f32 %v217, %v389
    %v391 = vpop.f32.mrb[0].mxu0
    %v392 = vadd.f32 %v221, %v391
    %393 = vmatprep.mubr.f32.mxu0 0.0
    %394 = vmatmul.mubr.f32.gmra.mrb[0].mxu0 %v75
    %v395 = vpop.f32.mrb[0].mxu0
    %v396 = vadd.f32 %v217, %v395
    %v397 = vpop.f32.mrb[0].mxu0
    %v398 = vadd.f32 %v221, %v397
    %399 = vdwg.mxu0
    %400 = vmatprep.subr.mxu0 %v81
    %401 = vmatpush1.msra.mxu0 %v80
    %402 = vmatprep.subr.mxu0 %v89
    %403 = vmatpush1.msra.mxu0 %v88
    %404 = vmatprep.subr.mxu0 %v97
    %405 = vmatpush1.msra.mxu0 %v96
    %406 = vmatprep.subr.mxu0 %v105
    %407 = vmatpush1.msra.mxu0 %v104
    %408 = vmatprep.subr.mxu0 %v113
    %409 = vmatpush1.msra.mxu0 %v112
    %410 = vmatprep.subr.mxu0 %v121
    %411 = vmatpush1.msra.mxu0 %v120
    %412 = vmatprep.subr.mxu0 %v129
    %413 = vmatpush1.msra.mxu0 %v128
    %414 = vmatprep.subr.mxu0 %v137
    %415 = vmatpush1.msra.mxu0 %v136
    %416 = vmatprep.subr.mxu0 %v145
    %417 = vmatpush1.msra.mxu0 %v144
    %418 = vmatprep.subr.mxu0 %v153
    %419 = vmatpush1.msra.mxu0 %v152
    %420 = vmatprep.subr.mxu0 %v161
    %421 = vmatpush1.msra.mxu0 %v160
    %422 = vmatprep.subr.mxu0 %v169
    %423 = vmatpush1.msra.mxu0 %v168
    %424 = vmatprep.subr.mxu0 %v177
    %425 = vmatpush1.msra.mxu0 %v176
    %426 = vmatprep.subr.mxu0 %v185
    %427 = vmatpush1.msra.mxu0 %v184
    %428 = vmatprep.subr.mxu0 %v193
    %429 = vmatpush1.msra.mxu0 %v192
    %430 = vmatprep.subr.mxu0 %v201
    %431 = vmatpush1.msra.mxu0 %v200
    %432 = vmatprep.subr.mxu0 0.0
    %433 = vmatpush1.msra.mxu0 0.0
    %434 = vmatprep.subr.mxu0 0.0
    %435 = vmatpush1.msra.mxu0 0.0
    %436 = vmatprep.subr.mxu0 0.0
    %437 = vmatpush1.msra.mxu0 0.0
    %438 = vmatprep.subr.mxu0 0.0
    %439 = vmatpush1.msra.mxu0 0.0
    %440 = vmatprep.subr.mxu0 0.0
    %441 = vmatpush1.msra.mxu0 0.0
    %442 = vmatprep.subr.mxu0 0.0
    %443 = vmatpush1.msra.mxu0 0.0
    %444 = vmatprep.subr.mxu0 0.0
    %445 = vmatpush1.msra.mxu0 0.0
    %446 = vmatprep.subr.mxu0 0.0
    %447 = vmatpush1.msra.mxu0 0.0
    %448 = vmatprep.subr.mxu0 0.0
    %449 = vmatpush1.msra.mxu0 0.0
    %450 = vmatprep.subr.mxu0 0.0
    %451 = vmatpush1.msra.mxu0 0.0
    %452 = vmatprep.subr.mxu0 0.0
    %453 = vmatpush1.msra.mxu0 0.0
    %454 = vmatprep.subr.mxu0 0.0
    %455 = vmatpush1.msra.mxu0 0.0
    %456 = vmatprep.subr.mxu0 0.0
    %457 = vmatpush1.msra.mxu0 0.0
    %458 = vmatprep.subr.mxu0 0.0
    %459 = vmatpush1.msra.mxu0 0.0
    %460 = vmatprep.subr.mxu0 0.0
    %461 = vmatpush1.msra.mxu0 0.0
    %462 = vmatprep.subr.mxu0 0.0
    %463 = vmatpush1.msra.mxu0 0.0
    %464 = vmatprep.mubr.f32.mxu0 0.0
    %465 = vmatmul.mubr.f32.gmra.mrb[0].mxu0 %v74
    %v466 = vpop.f32.mrb[0].mxu0
    %v467 = vadd.f32 %v225, %v466
    %v468 = vpop.f32.mrb[0].mxu0
    %v469 = vadd.f32 %v229, %v468
    %470 = vmatprep.mubr.f32.mxu0 0.0
    %471 = vmatmul.mubr.f32.gmra.mrb[0].mxu0 %v75
    %v472 = vpop.f32.mrb[0].mxu0
    %v473 = vadd.f32 %v225, %v472
    %v474 = vpop.f32.mrb[0].mxu0
    %v475 = vadd.f32 %v229, %v474
    %476 = vdwg.mxu0
    %477 = vmatprep.subr.mxu0 %v83
    %478 = vmatpush1.msra.mxu0 %v82
    %479 = vmatprep.subr.mxu0 %v91
    %480 = vmatpush1.msra.mxu0 %v90
    %481 = vmatprep.subr.mxu0 %v99
    %482 = vmatpush1.msra.mxu0 %v98
    %483 = vmatprep.subr.mxu0 %v107
    %484 = vmatpush1.msra.mxu0 %v106
    %485 = vmatprep.subr.mxu0 %v115
    %486 = vmatpush1.msra.mxu0 %v114
    %487 = vmatprep.subr.mxu0 %v123
    %488 = vmatpush1.msra.mxu0 %v122
    %489 = vmatprep.subr.mxu0 %v131
    %490 = vmatpush1.msra.mxu0 %v130
    %491 = vmatprep.subr.mxu0 %v139
    %492 = vmatpush1.msra.mxu0 %v138
    %493 = vmatprep.subr.mxu0 %v147
    %494 = vmatpush1.msra.mxu0 %v146
    %495 = vmatprep.subr.mxu0 %v155
    %496 = vmatpush1.msra.mxu0 %v154
    %497 = vmatprep.subr.mxu0 %v163
    %498 = vmatpush1.msra.mxu0 %v162
    %499 = vmatprep.subr.mxu0 %v171
    %500 = vmatpush1.msra.mxu0 %v170
    %501 = vmatprep.subr.mxu0 %v179
    %502 = vmatpush1.msra.mxu0 %v178
    %503 = vmatprep.subr.mxu0 %v187
    %504 = vmatpush1.msra.mxu0 %v186
    %505 = vmatprep.subr.mxu0 %v195
    %506 = vmatpush1.msra.mxu0 %v194
    %507 = vmatprep.subr.mxu0 %v203
    %508 = vmatpush1.msra.mxu0 %v202
    %509 = vmatprep.subr.mxu0 0.0
    %510 = vmatpush1.msra.mxu0 0.0
    %511 = vmatprep.subr.mxu0 0.0
    %512 = vmatpush1.msra.mxu0 0.0
    %513 = vmatprep.subr.mxu0 0.0
    %514 = vmatpush1.msra.mxu0 0.0
    %515 = vmatprep.subr.mxu0 0.0
    %516 = vmatpush1.msra.mxu0 0.0
    %517 = vmatprep.subr.mxu0 0.0
    %518 = vmatpush1.msra.mxu0 0.0
    %519 = vmatprep.subr.mxu0 0.0
    %520 = vmatpush1.msra.mxu0 0.0
    %521 = vmatprep.subr.mxu0 0.0
    %522 = vmatpush1.msra.mxu0 0.0
    %523 = vmatprep.subr.mxu0 0.0
    %524 = vmatpush1.msra.mxu0 0.0
    %525 = vmatprep.subr.mxu0 0.0
    %526 = vmatpush1.msra.mxu0 0.0
    %527 = vmatprep.subr.mxu0 0.0
    %528 = vmatpush1.msra.mxu0 0.0
    %529 = vmatprep.subr.mxu0 0.0
    %530 = vmatpush1.msra.mxu0 0.0
    %531 = vmatprep.subr.mxu0 0.0
    %532 = vmatpush1.msra.mxu0 0.0
    %533 = vmatprep.subr.mxu0 0.0
    %534 = vmatpush1.msra.mxu0 0.0
    %535 = vmatprep.subr.mxu0 0.0
    %536 = vmatpush1.msra.mxu0 0.0
    %537 = vmatprep.subr.mxu0 0.0
    %538 = vmatpush1.msra.mxu0 0.0
    %539 = vmatprep.subr.mxu0 0.0
    %540 = vmatpush1.msra.mxu0 0.0
    %541 = vmatprep.mubr.f32.mxu0 0.0
    %542 = vmatmul.mubr.f32.gmra.mrb[0].mxu0 %v74
    %v543 = vpop.f32.mrb[0].mxu0
    %v544 = vadd.f32 %v233, %v543
    %v545 = vpop.f32.mrb[0].mxu0
    %v546 = vadd.f32 %v237, %v545
    %547 = vmatprep.mubr.f32.mxu0 0.0
    %548 = vmatmul.mubr.f32.gmra.mrb[0].mxu0 %v75
    %v549 = vpop.f32.mrb[0].mxu0
    %v550 = vadd.f32 %v233, %v549
    %v551 = vpop.f32.mrb[0].mxu0
    %v552 = vadd.f32 %v237, %v551
    %553 = vdwg.mxu0
    %v554 = vmax.f32 %v313, 0.0
    %v555 = vmax.f32 %v315, 0.0
    %v556 = vmax.f32 %v390, 0.0
    %v557 = vmax.f32 %v392, 0.0
    %v558 = vmax.f32 %v467, 0.0
    %v559 = vmax.f32 %v469, 0.0
    %v560 = vmax.f32 %v544, 0.0
    %v561 = vmax.f32 %v546, 0.0
    %v562 = vmax.f32 %v319, 0.0
    %v563 = vmax.f32 %v321, 0.0
    %v564 = vmax.f32 %v396, 0.0
    %v565 = vmax.f32 %v398, 0.0
    %v566 = vmax.f32 %v473, 0.0
    %v567 = vmax.f32 %v475, 0.0
    %v568 = vmax.f32 %v550, 0.0
    %v569 = vmax.f32 %v552, 0.0
    %v570 = vld [vmem:[#allocation8] sm:$0xff]
    %v571 = vld [vmem:[#allocation8 + $0x8] sm:$0xff]
    %v572 = vld [vmem:[#allocation8 + $0x10] sm:$0xff]
    %v573 = vld [vmem:[#allocation8 + $0x18] sm:$0xff]
    %v574 = vld [vmem:[#allocation8 + $0x20] sm:$0xff]
    %v575 = vld [vmem:[#allocation8 + $0x28] sm:$0xff]
    %v576 = vld [vmem:[#allocation8 + $0x30] sm:$0xff]
    %v577 = vld [vmem:[#allocation8 + $0x38] sm:$0xff]
    %v578 = vld [vmem:[#allocation8 + $0x40] sm:$0xff]
    %v579 = vld [vmem:[#allocation8 + $0x48] sm:$0xff]
    %v580 = vld [vmem:[#allocation8 + $0x50] sm:$0xff]
    %v581 = vld [vmem:[#allocation8 + $0x58] sm:$0xff]
    %v582 = vld [vmem:[#allocation8 + $0x60] sm:$0xff]
    %v583 = vld [vmem:[#allocation8 + $0x68] sm:$0xff]
    %v584 = vld [vmem:[#allocation8 + $0x70] sm:$0xff]
    %v585 = vld [vmem:[#allocation8 + $0x78] sm:$0xff]
    %v586 = vld [vmem:[#allocation8 + $0x80] sm:$0xff]
    %v587 = vld [vmem:[#allocation8 + $0x88] sm:$0xff]
    %v588 = vld [vmem:[#allocation8 + $0x90] sm:$0xff]
    %v589 = vld [vmem:[#allocation8 + $0x98] sm:$0xff]
    %v590 = vld [vmem:[#allocation8 + $0xa0] sm:$0xff]
    %v591 = vld [vmem:[#allocation8 + $0xa8] sm:$0xff]
    %v592 = vld [vmem:[#allocation8 + $0xb0] sm:$0xff]
    %v593 = vld [vmem:[#allocation8 + $0xb8] sm:$0xff]
    %v594 = vld [vmem:[#allocation8 + $0xc0] sm:$0xff]
    %v595 = vld [vmem:[#allocation8 + $0xc8] sm:$0xff]
    %v596 = vld [vmem:[#allocation8 + $0xd0] sm:$0xff]
    %v597 = vld [vmem:[#allocation8 + $0xd8] sm:$0xff]
    %v598 = vld [vmem:[#allocation8 + $0xe0] sm:$0xff]
    %v599 = vld [vmem:[#allocation8 + $0xe8] sm:$0xff]
    %v600 = vld [vmem:[#allocation8 + $0xf0] sm:$0xff]
    %v601 = vld [vmem:[#allocation8 + $0xf8] sm:$0xff]
    %v602 = vld [vmem:[#allocation8 + $0x100] sm:$0xff]
    %v603 = vld [vmem:[#allocation8 + $0x108] sm:$0xff]
    %v604 = vld [vmem:[#allocation8 + $0x110] sm:$0xff]
    %v605 = vld [vmem:[#allocation8 + $0x118] sm:$0xff]
    %v606 = vld [vmem:[#allocation8 + $0x120] sm:$0xff]
    %v607 = vld [vmem:[#allocation8 + $0x128] sm:$0xff]
    %v608 = vld [vmem:[#allocation8 + $0x130] sm:$0xff]
    %v609 = vld [vmem:[#allocation8 + $0x138] sm:$0xff]
    %v610 = vld [vmem:[#allocation8 + $0x140] sm:$0xff]
    %v611 = vld [vmem:[#allocation8 + $0x148] sm:$0xff]
    %v612 = vld [vmem:[#allocation8 + $0x150] sm:$0xff]
    %v613 = vld [vmem:[#allocation8 + $0x158] sm:$0xff]
    %v614 = vld [vmem:[#allocation8 + $0x160] sm:$0xff]
    %v615 = vld [vmem:[#allocation8 + $0x168] sm:$0xff]
    %v616 = vld [vmem:[#allocation8 + $0x170] sm:$0xff]
    %v617 = vld [vmem:[#allocation8 + $0x178] sm:$0xff]
    %v618 = vld [vmem:[#allocation8 + $0x180] sm:$0xff]
    %v619 = vld [vmem:[#allocation8 + $0x188] sm:$0xff]
    %v620 = vld [vmem:[#allocation8 + $0x190] sm:$0xff]
    %v621 = vld [vmem:[#allocation8 + $0x198] sm:$0xff]
    %v622 = vld [vmem:[#allocation8 + $0x1a0] sm:$0xff]
    %v623 = vld [vmem:[#allocation8 + $0x1a8] sm:$0xff]
    %v624 = vld [vmem:[#allocation8 + $0x1b0] sm:$0xff]
    %v625 = vld [vmem:[#allocation8 + $0x1b8] sm:$0xff]
    %v626 = vld [vmem:[#allocation8 + $0x1c0] sm:$0xff]
    %v627 = vld [vmem:[#allocation8 + $0x1c8] sm:$0xff]
    %v628 = vld [vmem:[#allocation8 + $0x1d0] sm:$0xff]
    %v629 = vld [vmem:[#allocation8 + $0x1d8] sm:$0xff]
    %v630 = vld [vmem:[#allocation8 + $0x1e0] sm:$0xff]
    %v631 = vld [vmem:[#allocation8 + $0x1e8] sm:$0xff]
    %v632 = vld [vmem:[#allocation8 + $0x1f0] sm:$0xff]
    %v633 = vld [vmem:[#allocation8 + $0x1f8] sm:$0xff]
    %v634 = vld [vmem:[#allocation8 + $0x200] sm:$0xff]
    %v635 = vld [vmem:[#allocation8 + $0x208] sm:$0xff]
    %v636 = vld [vmem:[#allocation8 + $0x210] sm:$0xff]
    %v637 = vld [vmem:[#allocation8 + $0x218] sm:$0xff]
    %v638 = vld [vmem:[#allocation8 + $0x220] sm:$0xff]
    %v639 = vld [vmem:[#allocation8 + $0x228] sm:$0xff]
    %v640 = vld [vmem:[#allocation8 + $0x230] sm:$0xff]
    %v641 = vld [vmem:[#allocation8 + $0x238] sm:$0xff]
    %v642 = vld [vmem:[#allocation8 + $0x240] sm:$0xff]
    %v643 = vld [vmem:[#allocation8 + $0x248] sm:$0xff]
    %v644 = vld [vmem:[#allocation8 + $0x250] sm:$0xff]
    %v645 = vld [vmem:[#allocation8 + $0x258] sm:$0xff]
    %v646 = vld [vmem:[#allocation8 + $0x260] sm:$0xff]
    %v647 = vld [vmem:[#allocation8 + $0x268] sm:$0xff]
    %v648 = vld [vmem:[#allocation8 + $0x270] sm:$0xff]
    %v649 = vld [vmem:[#allocation8 + $0x278] sm:$0xff]
    %v650 = vld [vmem:[#allocation8 + $0x280] sm:$0xff]
    %v651 = vld [vmem:[#allocation8 + $0x288] sm:$0xff]
    %v652 = vld [vmem:[#allocation8 + $0x290] sm:$0xff]
    %v653 = vld [vmem:[#allocation8 + $0x298] sm:$0xff]
    %v654 = vld [vmem:[#allocation8 + $0x2a0] sm:$0xff]
    %v655 = vld [vmem:[#allocation8 + $0x2a8] sm:$0xff]
    %v656 = vld [vmem:[#allocation8 + $0x2b0] sm:$0xff]
    %v657 = vld [vmem:[#allocation8 + $0x2b8] sm:$0xff]
    %v658 = vld [vmem:[#allocation8 + $0x2c0] sm:$0xff]
    %v659 = vld [vmem:[#allocation8 + $0x2c8] sm:$0xff]
    %v660 = vld [vmem:[#allocation8 + $0x2d0] sm:$0xff]
    %v661 = vld [vmem:[#allocation8 + $0x2d8] sm:$0xff]
    %v662 = vld [vmem:[#allocation8 + $0x2e0] sm:$0xff]
    %v663 = vld [vmem:[#allocation8 + $0x2e8] sm:$0xff]
    %v664 = vld [vmem:[#allocation8 + $0x2f0] sm:$0xff]
    %v665 = vld [vmem:[#allocation8 + $0x2f8] sm:$0xff]
    %v666 = vld [vmem:[#allocation8 + $0x300] sm:$0xff]
    %v667 = vld [vmem:[#allocation8 + $0x308] sm:$0xff]
    %v668 = vld [vmem:[#allocation8 + $0x310] sm:$0xff]
    %v669 = vld [vmem:[#allocation8 + $0x318] sm:$0xff]
    %v670 = vld [vmem:[#allocation8 + $0x320] sm:$0xff]
    %v671 = vld [vmem:[#allocation8 + $0x328] sm:$0xff]
    %v672 = vld [vmem:[#allocation8 + $0x330] sm:$0xff]
    %v673 = vld [vmem:[#allocation8 + $0x338] sm:$0xff]
    %v674 = vld [vmem:[#allocation8 + $0x340] sm:$0xff]
    %v675 = vld [vmem:[#allocation8 + $0x348] sm:$0xff]
    %v676 = vld [vmem:[#allocation8 + $0x350] sm:$0xff]
    %v677 = vld [vmem:[#allocation8 + $0x358] sm:$0xff]
    %v678 = vld [vmem:[#allocation8 + $0x360] sm:$0xff]
    %v679 = vld [vmem:[#allocation8 + $0x368] sm:$0xff]
    %v680 = vld [vmem:[#allocation8 + $0x370] sm:$0xff]
    %v681 = vld [vmem:[#allocation8 + $0x378] sm:$0xff]
    %v682 = vld [vmem:[#allocation8 + $0x380] sm:$0xff]
    %v683 = vld [vmem:[#allocation8 + $0x388] sm:$0xff]
    %v684 = vld [vmem:[#allocation8 + $0x390] sm:$0xff]
    %v685 = vld [vmem:[#allocation8 + $0x398] sm:$0xff]
    %v686 = vld [vmem:[#allocation8 + $0x3a0] sm:$0xff]
    %v687 = vld [vmem:[#allocation8 + $0x3a8] sm:$0xff]
    %v688 = vld [vmem:[#allocation8 + $0x3b0] sm:$0xff]
    %v689 = vld [vmem:[#allocation8 + $0x3b8] sm:$0xff]
    %v690 = vld [vmem:[#allocation8 + $0x3c0] sm:$0xff]
    %v691 = vld [vmem:[#allocation8 + $0x3c8] sm:$0xff]
    %v692 = vld [vmem:[#allocation8 + $0x3d0] sm:$0xff]
    %v693 = vld [vmem:[#allocation8 + $0x3d8] sm:$0xff]
    %v694 = vld [vmem:[#allocation8 + $0x3e0] sm:$0xff]
    %v695 = vld [vmem:[#allocation8 + $0x3e8] sm:$0xff]
    %v696 = vld [vmem:[#allocation8 + $0x3f0] sm:$0xff]
    %v697 = vld [vmem:[#allocation8 + $0x3f8] sm:$0xff]
    %v698 = vld [vmem:[%s4] sm:$0x1]
    %v700 = vlaneseq
    %v701 = vshrl.u32 %v700, 7
    %v702 = vsub.s32 0, %v701
    %v703 = vrot.slane %v698, %v702
    %705 = vmatprep.subr.mxu0 0.0
    %706 = vmatpush1.msra.mxu0 %v570
    %707 = vmatprep.subr.mxu0 0.0
    %708 = vmatpush1.msra.mxu0 %v571
    %709 = vmatprep.subr.mxu0 0.0
    %710 = vmatpush1.msra.mxu0 %v572
    %711 = vmatprep.subr.mxu0 0.0
    %712 = vmatpush1.msra.mxu0 %v573
    %713 = vmatprep.subr.mxu0 0.0
    %714 = vmatpush1.msra.mxu0 %v574
    %715 = vmatprep.subr.mxu0 0.0
    %716 = vmatpush1.msra.mxu0 %v575
    %717 = vmatprep.subr.mxu0 0.0
    %718 = vmatpush1.msra.mxu0 %v576
    %719 = vmatprep.subr.mxu0 0.0
    %720 = vmatpush1.msra.mxu0 %v577
    %721 = vmatprep.subr.mxu0 0.0
    %722 = vmatpush1.msra.mxu0 %v578
    %723 = vmatprep.subr.mxu0 0.0
    %724 = vmatpush1.msra.mxu0 %v579
    %725 = vmatprep.subr.mxu0 0.0
    %726 = vmatpush1.msra.mxu0 %v580
    %727 = vmatprep.subr.mxu0 0.0
    %728 = vmatpush1.msra.mxu0 %v581
    %729 = vmatprep.subr.mxu0 0.0
    %730 = vmatpush1.msra.mxu0 %v582
    %731 = vmatprep.subr.mxu0 0.0
    %732 = vmatpush1.msra.mxu0 %v583
    %733 = vmatprep.subr.mxu0 0.0
    %734 = vmatpush1.msra.mxu0 %v584
    %735 = vmatprep.subr.mxu0 0.0
    %736 = vmatpush1.msra.mxu0 %v585
    %737 = vmatprep.subr.mxu0 0.0
    %738 = vmatpush1.msra.mxu0 %v586
    %739 = vmatprep.subr.mxu0 0.0
    %740 = vmatpush1.msra.mxu0 %v587
    %741 = vmatprep.subr.mxu0 0.0
    %742 = vmatpush1.msra.mxu0 %v588
    %743 = vmatprep.subr.mxu0 0.0
    %744 = vmatpush1.msra.mxu0 %v589
    %745 = vmatprep.subr.mxu0 0.0
    %746 = vmatpush1.msra.mxu0 %v590
    %747 = vmatprep.subr.mxu0 0.0
    %748 = vmatpush1.msra.mxu0 %v591
    %749 = vmatprep.subr.mxu0 0.0
    %750 = vmatpush1.msra.mxu0 %v592
    %751 = vmatprep.subr.mxu0 0.0
    %752 = vmatpush1.msra.mxu0 %v593
    %753 = vmatprep.subr.mxu0 0.0
    %754 = vmatpush1.msra.mxu0 %v594
    %755 = vmatprep.subr.mxu0 0.0
    %756 = vmatpush1.msra.mxu0 %v595
    %757 = vmatprep.subr.mxu0 0.0
    %758 = vmatpush1.msra.mxu0 %v596
    %759 = vmatprep.subr.mxu0 0.0
    %760 = vmatpush1.msra.mxu0 %v597
    %761 = vmatprep.subr.mxu0 0.0
    %762 = vmatpush1.msra.mxu0 %v598
    %763 = vmatprep.subr.mxu0 0.0
    %764 = vmatpush1.msra.mxu0 %v599
    %765 = vmatprep.subr.mxu0 0.0
    %766 = vmatpush1.msra.mxu0 %v600
    %767 = vmatprep.subr.mxu0 0.0
    %768 = vmatpush1.msra.mxu0 %v601
    %769 = vmatprep.mubr.f32.mxu0 %v555
    %770 = vmatmul.mubr.f32.gmra.mrb[0].mxu0 %v554
    %v771 = vpop.f32.mrb[0].mxu0
    %v772 = vadd.f32 %v703, %v771
    %v773 = vpop.f32.mrb[0].mxu0
    %774 = vmatprep.mubr.f32.mxu0 %v563
    %775 = vmatmul.mubr.f32.gmra.mrb[0].mxu0 %v562
    %v776 = vpop.f32.mrb[0].mxu0
    %v777 = vadd.f32 %v703, %v776
    %v778 = vpop.f32.mrb[0].mxu0
    %779 = vdwg.mxu0
    %780 = vmatprep.subr.mxu0 0.0
    %781 = vmatpush1.msra.mxu0 %v602
    %782 = vmatprep.subr.mxu0 0.0
    %783 = vmatpush1.msra.mxu0 %v603
    %784 = vmatprep.subr.mxu0 0.0
    %785 = vmatpush1.msra.mxu0 %v604
    %786 = vmatprep.subr.mxu0 0.0
    %787 = vmatpush1.msra.mxu0 %v605
    %788 = vmatprep.subr.mxu0 0.0
    %789 = vmatpush1.msra.mxu0 %v606
    %790 = vmatprep.subr.mxu0 0.0
    %791 = vmatpush1.msra.mxu0 %v607
    %792 = vmatprep.subr.mxu0 0.0
    %793 = vmatpush1.msra.mxu0 %v608
    %794 = vmatprep.subr.mxu0 0.0
    %795 = vmatpush1.msra.mxu0 %v609
    %796 = vmatprep.subr.mxu0 0.0
    %797 = vmatpush1.msra.mxu0 %v610
    %798 = vmatprep.subr.mxu0 0.0
    %799 = vmatpush1.msra.mxu0 %v611
    %800 = vmatprep.subr.mxu0 0.0
    %801 = vmatpush1.msra.mxu0 %v612
    %802 = vmatprep.subr.mxu0 0.0
    %803 = vmatpush1.msra.mxu0 %v613
    %804 = vmatprep.subr.mxu0 0.0
    %805 = vmatpush1.msra.mxu0 %v614
    %806 = vmatprep.subr.mxu0 0.0
    %807 = vmatpush1.msra.mxu0 %v615
    %808 = vmatprep.subr.mxu0 0.0
    %809 = vmatpush1.msra.mxu0 %v616
    %810 = vmatprep.subr.mxu0 0.0
    %811 = vmatpush1.msra.mxu0 %v617
    %812 = vmatprep.subr.mxu0 0.0
    %813 = vmatpush1.msra.mxu0 %v618
    %814 = vmatprep.subr.mxu0 0.0
    %815 = vmatpush1.msra.mxu0 %v619
    %816 = vmatprep.subr.mxu0 0.0
    %817 = vmatpush1.msra.mxu0 %v620
    %818 = vmatprep.subr.mxu0 0.0
    %819 = vmatpush1.msra.mxu0 %v621
    %820 = vmatprep.subr.mxu0 0.0
    %821 = vmatpush1.msra.mxu0 %v622
    %822 = vmatprep.subr.mxu0 0.0
    %823 = vmatpush1.msra.mxu0 %v623
    %824 = vmatprep.subr.mxu0 0.0
    %825 = vmatpush1.msra.mxu0 %v624
    %826 = vmatprep.subr.mxu0 0.0
    %827 = vmatpush1.msra.mxu0 %v625
    %828 = vmatprep.subr.mxu0 0.0
    %829 = vmatpush1.msra.mxu0 %v626
    %830 = vmatprep.subr.mxu0 0.0
    %831 = vmatpush1.msra.mxu0 %v627
    %832 = vmatprep.subr.mxu0 0.0
    %833 = vmatpush1.msra.mxu0 %v628
    %834 = vmatprep.subr.mxu0 0.0
    %835 = vmatpush1.msra.mxu0 %v629
    %836 = vmatprep.subr.mxu0 0.0
    %837 = vmatpush1.msra.mxu0 %v630
    %838 = vmatprep.subr.mxu0 0.0
    %839 = vmatpush1.msra.mxu0 %v631
    %840 = vmatprep.subr.mxu0 0.0
    %841 = vmatpush1.msra.mxu0 %v632
    %842 = vmatprep.subr.mxu0 0.0
    %843 = vmatpush1.msra.mxu0 %v633
    %844 = vmatprep.mubr.f32.mxu0 %v557
    %845 = vmatmul.mubr.f32.gmra.mrb[0].mxu0 %v556
    %v846 = vpop.f32.mrb[0].mxu0
    %v847 = vadd.f32 %v772, %v846
    %v848 = vpop.f32.mrb[0].mxu0
    %849 = vmatprep.mubr.f32.mxu0 %v565
    %850 = vmatmul.mubr.f32.gmra.mrb[0].mxu0 %v564
    %v851 = vpop.f32.mrb[0].mxu0
    %v852 = vadd.f32 %v777, %v851
    %v853 = vpop.f32.mrb[0].mxu0
    %854 = vdwg.mxu0
    %855 = vmatprep.subr.mxu0 0.0
    %856 = vmatpush1.msra.mxu0 %v634
    %857 = vmatprep.subr.mxu0 0.0
    %858 = vmatpush1.msra.mxu0 %v635
    %859 = vmatprep.subr.mxu0 0.0
    %860 = vmatpush1.msra.mxu0 %v636
    %861 = vmatprep.subr.mxu0 0.0
    %862 = vmatpush1.msra.mxu0 %v637
    %863 = vmatprep.subr.mxu0 0.0
    %864 = vmatpush1.msra.mxu0 %v638
    %865 = vmatprep.subr.mxu0 0.0
    %866 = vmatpush1.msra.mxu0 %v639
    %867 = vmatprep.subr.mxu0 0.0
    %868 = vmatpush1.msra.mxu0 %v640
    %869 = vmatprep.subr.mxu0 0.0
    %870 = vmatpush1.msra.mxu0 %v641
    %871 = vmatprep.subr.mxu0 0.0
    %872 = vmatpush1.msra.mxu0 %v642
    %873 = vmatprep.subr.mxu0 0.0
    %874 = vmatpush1.msra.mxu0 %v643
    %875 = vmatprep.subr.mxu0 0.0
    %876 = vmatpush1.msra.mxu0 %v644
    %877 = vmatprep.subr.mxu0 0.0
    %878 = vmatpush1.msra.mxu0 %v645
    %879 = vmatprep.subr.mxu0 0.0
    %880 = vmatpush1.msra.mxu0 %v646
    %881 = vmatprep.subr.mxu0 0.0
    %882 = vmatpush1.msra.mxu0 %v647
    %883 = vmatprep.subr.mxu0 0.0
    %884 = vmatpush1.msra.mxu0 %v648
    %885 = vmatprep.subr.mxu0 0.0
    %886 = vmatpush1.msra.mxu0 %v649
    %887 = vmatprep.subr.mxu0 0.0
    %888 = vmatpush1.msra.mxu0 %v650
    %889 = vmatprep.subr.mxu0 0.0
    %890 = vmatpush1.msra.mxu0 %v651
    %891 = vmatprep.subr.mxu0 0.0
    %892 = vmatpush1.msra.mxu0 %v652
    %893 = vmatprep.subr.mxu0 0.0
    %894 = vmatpush1.msra.mxu0 %v653
    %895 = vmatprep.subr.mxu0 0.0
    %896 = vmatpush1.msra.mxu0 %v654
    %897 = vmatprep.subr.mxu0 0.0
    %898 = vmatpush1.msra.mxu0 %v655
    %899 = vmatprep.subr.mxu0 0.0
    %900 = vmatpush1.msra.mxu0 %v656
    %901 = vmatprep.subr.mxu0 0.0
    %902 = vmatpush1.msra.mxu0 %v657
    %903 = vmatprep.subr.mxu0 0.0
    %904 = vmatpush1.msra.mxu0 %v658
    %905 = vmatprep.subr.mxu0 0.0
    %906 = vmatpush1.msra.mxu0 %v659
    %907 = vmatprep.subr.mxu0 0.0
    %908 = vmatpush1.msra.mxu0 %v660
    %909 = vmatprep.subr.mxu0 0.0
    %910 = vmatpush1.msra.mxu0 %v661
    %911 = vmatprep.subr.mxu0 0.0
    %912 = vmatpush1.msra.mxu0 %v662
    %913 = vmatprep.subr.mxu0 0.0
    %914 = vmatpush1.msra.mxu0 %v663
    %915 = vmatprep.subr.mxu0 0.0
    %916 = vmatpush1.msra.mxu0 %v664
    %917 = vmatprep.subr.mxu0 0.0
    %918 = vmatpush1.msra.mxu0 %v665
    %919 = vmatprep.mubr.f32.mxu0 %v559
    %920 = vmatmul.mubr.f32.gmra.mrb[0].mxu0 %v558
    %v921 = vpop.f32.mrb[0].mxu0
    %v922 = vadd.f32 %v847, %v921
    %v923 = vpop.f32.mrb[0].mxu0
    %924 = vmatprep.mubr.f32.mxu0 %v567
    %925 = vmatmul.mubr.f32.gmra.mrb[0].mxu0 %v566
    %v926 = vpop.f32.mrb[0].mxu0
    %v927 = vadd.f32 %v852, %v926
    %v928 = vpop.f32.mrb[0].mxu0
    %929 = vdwg.mxu0
    %930 = vmatprep.subr.mxu0 0.0
    %931 = vmatpush1.msra.mxu0 %v666
    %932 = vmatprep.subr.mxu0 0.0
    %933 = vmatpush1.msra.mxu0 %v667
    %934 = vmatprep.subr.mxu0 0.0
    %935 = vmatpush1.msra.mxu0 %v668
    %936 = vmatprep.subr.mxu0 0.0
    %937 = vmatpush1.msra.mxu0 %v669
    %938 = vmatprep.subr.mxu0 0.0
    %939 = vmatpush1.msra.mxu0 %v670
    %940 = vmatprep.subr.mxu0 0.0
    %941 = vmatpush1.msra.mxu0 %v671
    %942 = vmatprep.subr.mxu0 0.0
    %943 = vmatpush1.msra.mxu0 %v672
    %944 = vmatprep.subr.mxu0 0.0
    %945 = vmatpush1.msra.mxu0 %v673
    %946 = vmatprep.subr.mxu0 0.0
    %947 = vmatpush1.msra.mxu0 %v674
    %948 = vmatprep.subr.mxu0 0.0
    %949 = vmatpush1.msra.mxu0 %v675
    %950 = vmatprep.subr.mxu0 0.0
    %951 = vmatpush1.msra.mxu0 %v676
    %952 = vmatprep.subr.mxu0 0.0
    %953 = vmatpush1.msra.mxu0 %v677
    %954 = vmatprep.subr.mxu0 0.0
    %955 = vmatpush1.msra.mxu0 %v678
    %956 = vmatprep.subr.mxu0 0.0
    %957 = vmatpush1.msra.mxu0 %v679
    %958 = vmatprep.subr.mxu0 0.0
    %959 = vmatpush1.msra.mxu0 %v680
    %960 = vmatprep.subr.mxu0 0.0
    %961 = vmatpush1.msra.mxu0 %v681
    %962 = vmatprep.subr.mxu0 0.0
    %963 = vmatpush1.msra.mxu0 %v682
    %964 = vmatprep.subr.mxu0 0.0
    %965 = vmatpush1.msra.mxu0 %v683
    %966 = vmatprep.subr.mxu0 0.0
    %967 = vmatpush1.msra.mxu0 %v684
    %968 = vmatprep.subr.mxu0 0.0
    %969 = vmatpush1.msra.mxu0 %v685
    %970 = vmatprep.subr.mxu0 0.0
    %971 = vmatpush1.msra.mxu0 %v686
    %972 = vmatprep.subr.mxu0 0.0
    %973 = vmatpush1.msra.mxu0 %v687
    %974 = vmatprep.subr.mxu0 0.0
    %975 = vmatpush1.msra.mxu0 %v688
    %976 = vmatprep.subr.mxu0 0.0
    %977 = vmatpush1.msra.mxu0 %v689
    %978 = vmatprep.subr.mxu0 0.0
    %979 = vmatpush1.msra.mxu0 %v690
    %980 = vmatprep.subr.mxu0 0.0
    %981 = vmatpush1.msra.mxu0 %v691
    %982 = vmatprep.subr.mxu0 0.0
    %983 = vmatpush1.msra.mxu0 %v692
    %984 = vmatprep.subr.mxu0 0.0
    %985 = vmatpush1.msra.mxu0 %v693
    %986 = vmatprep.subr.mxu0 0.0
    %987 = vmatpush1.msra.mxu0 %v694
    %988 = vmatprep.subr.mxu0 0.0
    %989 = vmatpush1.msra.mxu0 %v695
    %990 = vmatprep.subr.mxu0 0.0
    %991 = vmatpush1.msra.mxu0 %v696
    %992 = vmatprep.subr.mxu0 0.0
    %993 = vmatpush1.msra.mxu0 %v697
    %994 = vmatprep.mubr.f32.mxu0 %v561
    %995 = vmatmul.mubr.f32.gmra.mrb[0].mxu0 %v560
    %v996 = vpop.f32.mrb[0].mxu0
    %v997 = vadd.f32 %v922, %v996
    %v998 = vpop.f32.mrb[0].mxu0
    %999 = vmatprep.mubr.f32.mxu0 %v569
    %1000 = vmatmul.mubr.f32.gmra.mrb[0].mxu0 %v568
    %v1001 = vpop.f32.mrb[0].mxu0
    %v1002 = vadd.f32 %v927, %v1001
    %v1003 = vpop.f32.mrb[0].mxu0
    %1004 = vdwg.mxu0
    %1005 = vst [vmem:[#allocation10] sm:$0xff] %v997
    %1006 = vst [vmem:[#allocation10 + $0x8] sm:$0xff] %v1002
    // Predicated region
    $region38: #{tpu_custom_call.1} parent=1 // pred_check
      _
    $region39: #{tpu_custom_call.1} parent=1 // pred_check_branch
      %1008 = sbr.rel (0) target = $region41
    $region40: #{tpu_custom_call.1} parent=1 // pred_region
      %s1010 = ssub.s32 256, 256
      %1011 = vsyncadd [#allocation4], %s1010
      %s1012 = sshll.u32 [#allocation10], 4
      %s1013 = int_to_ptr.vmem [resolvable:$true] %s1012
      %1018 = dma.vmem_to_hbm [thread:$0]  %s1013, 256, %s5, [#allocation4], 128, 128, 8
    $region41: #{tpu_custom_call.1} parent=1 // pred_fallthru
      _
    // Predicated region
    $region42: #{tpu_custom_call.1} parent=1 // pred_check
      _
    $region43: #{tpu_custom_call.1} parent=1 // pred_check_branch
      %1020 = sbr.rel (0) target = $region45
    $region44: #{tpu_custom_call.1} parent=1 // pred_region
      %1021 = dma.done [#allocation4], 256
    $region45: #{tpu_custom_call.1} parent=1 // pred_fallthru
      _
    %1022 = vsyncpa [#allocation3], 1
    %1023 = vsyncpa [#allocation6], 1
    %1024 = vsyncpa [#allocation9], 1
    %1025 = vsyncpa [#allocation4], 1

</llo_original>
